<compile_context>
chip_gen: v5e
topology: v5e:2x2
jax: 0.10.0
libtpu: 0.0.40
codegen_flags: <defaults>
</compile_context>

<pallas_src>
import jax
import jax.numpy as jnp
from jax.experimental import pallas as pl
from jax.experimental.pallas import tpu as pltpu

EXPANSION = 1          # Block.expansion in the reference module
BN_EPS = 1e-5


# ---------------------------------------------------------------------------
# Pallas kernels: tiled matmul with fused bias (+residual) (+ReLU) epilogue
# ---------------------------------------------------------------------------
def _make_mm_kernel(apply_relu: bool, has_residual: bool, multi_k: bool):
    """out = maybe_relu(a @ w + bias (+ residual)); bf16 operands, f32 accumulate."""

    def kernel(*refs):
        if multi_k:
            # K reduction over grid axis 2 with an f32 accumulator scratch.
            if has_residual:
                x_ref, w_ref, b_ref, r_ref, o_ref, acc_ref = refs
            else:
                x_ref, w_ref, b_ref, o_ref, acc_ref = refs
                r_ref = None

            @pl.when(pl.program_id(2) == 0)
            def _():
                acc_ref[...] = jnp.zeros_like(acc_ref)

            acc_ref[...] += jnp.dot(x_ref[...], w_ref[...],
                                    preferred_element_type=jnp.float32)

            @pl.when(pl.program_id(2) == pl.num_programs(2) - 1)
            def _():
                out = acc_ref[...] + b_ref[...]
                if has_residual:
                    out = out + r_ref[...].astype(jnp.float32)
                if apply_relu:
                    out = jnp.maximum(out, 0.0)
                o_ref[...] = out.astype(o_ref.dtype)
        else:
            # Single K step: no scratch, no phases -- epilogue written directly.
            if has_residual:
                x_ref, w_ref, b_ref, r_ref, o_ref = refs
            else:
                x_ref, w_ref, b_ref, o_ref = refs
                r_ref = None
            out = jnp.dot(x_ref[...], w_ref[...],
                          preferred_element_type=jnp.float32) + b_ref[...]
            if has_residual:
                out = out + r_ref[...].astype(jnp.float32)
            if apply_relu:
                out = jnp.maximum(out, 0.0)
            o_ref[...] = out.astype(o_ref.dtype)

    return kernel


# ---------------------------------------------------------------------------
# Wrappers (padding / im2col / tiling glue)
# ---------------------------------------------------------------------------
def _round_up(v, m):
    return (v + m - 1) // m * m


def _pick_tiles(M, N, K):
    """Per-call tile sizes: fat single-step K, large M/N tiles, >=2 parallel blocks."""
    Kp128 = _round_up(K, 128)
    tk = Kp128 if Kp128 <= 1536 else 512          # single K grid step when it fits
    Np = _round_up(N, 128)
    tn = 256 if (Np % 256 == 0 and Np >= 256) else 128
    Mp128 = _round_up(M, 128)
    tm = 512
    while tm > 128 and Mp128 < tm:                # don't over-pad tiny M
        tm //= 2
    # Keep at least 2 parallel (i, j) output blocks when possible (v7x: 2 TensorCores).
    if tm > 128 and (pl.cdiv(Mp128, tm) * (Np // tn)) < 2:
        tm //= 2
    return tm, tn, tk


def matmul_bias_act(a, w, bias, *, relu, residual=None, out_dtype=jnp.float32):
    """out[:M,:N] = maybe_relu(a @ w + bias (+ residual)).

    a: (M, K), w: (K, N) -- cast to bf16 for the MXU; bias f32 (N,); residual (M, N)."""
    M, K = a.shape
    Kw, N = w.shape
    assert Kw == K
    tm, tn, tk = _pick_tiles(M, N, K)
    Mp = _round_up(M, tm)
    Np = _round_up(N, tn)
    Kp = _round_up(K, tk)
    multi_k = (Kp // tk) > 1

    ap = jnp.pad(a.astype(jnp.bfloat16), ((0, Mp - M), (0, Kp - K)))
    wp = jnp.pad(w.astype(jnp.bfloat16), ((0, Kp - K), (0, Np - N)))
    bp = jnp.pad(bias.astype(jnp.float32).reshape(1, -1), ((0, 0), (0, Np - N)))
    has_res = residual is not None

    args = [ap, wp, bp]
    if multi_k:
        in_specs = [
            pl.BlockSpec((tm, tk), lambda i, j, k: (i, k)),
            pl.BlockSpec((tk, tn), lambda i, j, k: (k, j)),
            pl.BlockSpec((1, tn), lambda i, j, k: (0, j)),
        ]
        res_spec = pl.BlockSpec((tm, tn), lambda i, j, k: (i, j))
        out_spec = pl.BlockSpec((tm, tn), lambda i, j, k: (i, j))
        grid = (Mp // tm, Np // tn, Kp // tk)
        scratch = [pltpu.VMEM((tm, tn), jnp.float32)]
        dims = ("parallel", "parallel", "arbitrary")
    else:
        in_specs = [
            pl.BlockSpec((tm, tk), lambda i, j: (i, 0)),
            pl.BlockSpec((tk, tn), lambda i, j: (0, j)),
            pl.BlockSpec((1, tn), lambda i, j: (0, j)),
        ]
        res_spec = pl.BlockSpec((tm, tn), lambda i, j: (i, j))
        out_spec = pl.BlockSpec((tm, tn), lambda i, j: (i, j))
        grid = (Mp // tm, Np // tn)
        scratch = []
        dims = ("parallel", "parallel")

    if has_res:
        rp = jnp.pad(residual.astype(jnp.bfloat16), ((0, Mp - M), (0, Np - N)))
        args.append(rp)
        in_specs.append(res_spec)

    out = pl.pallas_call(
        _make_mm_kernel(relu, has_res, multi_k),
        out_shape=jax.ShapeDtypeStruct((Mp, Np), out_dtype),
        grid_spec=pltpu.PrefetchScalarGridSpec(
            num_scalar_prefetch=0,
            grid=grid,
            in_specs=in_specs,
            out_specs=out_spec,
            scratch_shapes=scratch),
        compiler_params=pltpu.CompilerParams(dimension_semantics=dims),
    )(*args)
    return out[:M, :N]


def conv_bn_act(x, w, bias, *, stride, padding, relu, residual=None,
                out_dtype=jnp.bfloat16):
    """Conv2d + folded (conv bias & eval BatchNorm) (+residual) (+ReLU) via bf16 im2col
       + the fused Pallas matmul kernel.  x: (N,H,W,Cin) bf16; w: (KH,KW,Cin,Cout) bf16
       (BN scale pre-folded per Cout); bias: f32 (Cout,)."""
    N, H, W, Cin = x.shape
    KH, KW, _, Cout = w.shape
    OH = (H + 2 * padding - KH) // stride + 1
    OW = (W + 2 * padding - KW) // stride + 1
    xp = jnp.pad(x, ((0, 0), (padding, padding), (padding, padding), (0, 0)))
    cols = [xp[:, kh:kh + stride * OH:stride, kw:kw + stride * OW:stride, :]
            for kh in range(KH) for kw in range(KW)]
    patches = jnp.concatenate(cols, axis=-1)               # bf16, (N, OH, OW, KH*KW*Cin)
    a = patches.reshape(N * OH * OW, KH * KW * Cin)
    wm = w.reshape(KH * KW * Cin, Cout)
    res = residual.reshape(N * OH * OW, Cout) if residual is not None else None
    out = matmul_bias_act(a, wm, bias, relu=relu, residual=res, out_dtype=out_dtype)
    return out.reshape(N, OH, OW, Cout)


# ---------------------------------------------------------------------------
# Block parameters (deterministic synthetic Conv + eval-mode BatchNorm, folded)
# ---------------------------------------------------------------------------
def _fold_conv_bn(key, kh, kw, cin, cout, conv_bias):
    k = jax.random.split(key, 6)
    fan_in = kh * kw * cin
    w = jax.random.normal(k[0], (kh, kw, cin, cout), jnp.float32) / jnp.sqrt(fan_in)
    cb = (0.01 * jax.random.normal(k[1], (cout,), jnp.float32)
          if conv_bias else jnp.zeros((cout,), jnp.float32))
    gamma = 1.0 + 0.1 * jax.random.normal(k[2], (cout,), jnp.float32)
    beta = 0.1 * jax.random.normal(k[3], (cout,), jnp.float32)
    mean = 0.1 * jax.random.normal(k[4], (cout,), jnp.float32)
    var = 1.0 + 0.1 * jax.random.uniform(k[5], (cout,), jnp.float32)
    scale = gamma / jnp.sqrt(var + BN_EPS)
    w_folded = (w * scale).astype(jnp.bfloat16)   # fold BN scale into the weights
    bias = beta + scale * (cb - mean)             # epilogue bias stays f32
    raw = (w, cb, gamma, beta, mean, var)         # kept for the pure-JAX reference
    return w_folded, bias, raw


def make_block_params(key, in_channels, out_channels, stride):
    k1, k2, k3 = jax.random.split(key, 3)
    params = {
        'conv1': _fold_conv_bn(k1, 3, 3, in_channels, out_channels, conv_bias=False),
        'conv2': _fold_conv_bn(k2, 3, 3, out_channels, out_channels * EXPANSION,
                               conv_bias=True),
    }
    if stride != 1 or in_channels != EXPANSION * out_channels:
        params['shortcut'] = _fold_conv_bn(k3, 3, 3, in_channels,
                                           EXPANSION * out_channels, conv_bias=True)
    return params


# ---------------------------------------------------------------------------
# Block forward (Pallas) and pure-JAX f32 reference
# ---------------------------------------------------------------------------
def block_forward(x_nchw, params, stride):
    x = jnp.transpose(x_nchw, (0, 2, 3, 1)).astype(jnp.bfloat16)     # NCHW -> NHWC
    w1, b1, _ = params['conv1']
    w2, b2, _ = params['conv2']
    # conv1 + BN + ReLU  (intermediate kept in bf16)
    out = conv_bn_act(x, w1, b1, stride=stride, padding=1, relu=True,
                      out_dtype=jnp.bfloat16)
    # shortcut branch
    if 'shortcut' in params:
        ws, bs, _ = params['shortcut']
        sc = conv_bn_act(x, ws, bs, stride=stride, padding=1, relu=False,
                         out_dtype=jnp.bfloat16)
    else:
        sc = x
    # conv2 + BN + residual add + final ReLU, all fused in one Pallas call (f32 output)
    out = conv_bn_act(out, w2, b2, stride=1, padding=1, relu=True, residual=sc,
                      out_dtype=jnp.float32)
    return jnp.transpose(out, (0, 3, 1, 2))                          # NHWC -> NCHW


def _ref_conv_bn(x, raw, stride, padding):
    w, cb, gamma, beta, mean, var = raw
    y = jax.lax.conv_general_dilated(
        x, w, window_strides=(stride, stride),
        padding=[(padding, padding), (padding, padding)],
        dimension_numbers=('NCHW', 'HWIO', 'NCHW'))
    y = y + cb[None, :, None, None]
    s = gamma / jnp.sqrt(var + BN_EPS)
    return s[None, :, None, None] * (y - mean[None, :, None, None]) + beta[None, :, None, None]


def block_reference(x, params, stride):
    y = jnp.maximum(_ref_conv_bn(x, params['conv1'][2], stride, 1), 0.0)
    y = _ref_conv_bn(y, params['conv2'][2], 1, 1)
    sc = (_ref_conv_bn(x, params['shortcut'][2], stride, 1)
          if 'shortcut' in params else x)
    return jnp.maximum(y + sc, 0.0)


# ---------------------------------------------------------------------------
if __name__ == "__main__":
    key = jax.random.PRNGKey(0)
    kp1, kx1, kp2, kx2 = jax.random.split(key, 4)

    # Case 1: downsampling Block with conv shortcut (stride=2, channel change).
    params1 = make_block_params(kp1, in_channels=4, out_channels=8, stride=2)
    x1 = jax.random.normal(kx1, (2, 4, 16, 16), jnp.float32)
    out1 = jax.jit(lambda v: block_forward(v, params1, 2))(x1)
    jax.block_until_ready(out1)
    assert out1.shape == (2, 8, 8, 8)
    err1 = float(jnp.max(jnp.abs(out1 - block_reference(x1, params1, 2))))
    assert err1 < 1e-1, f"mismatch vs reference: {err1}"

    # Case 2: identity-shortcut Block (stride=1, in_channels == out_channels).
    params2 = make_block_params(kp2, in_channels=8, out_channels=8, stride=1)
    x2 = jax.random.normal(kx2, (2, 8, 16, 16), jnp.float32)
    out2 = jax.jit(lambda v: block_forward(v, params2, 1))(x2)
    jax.block_until_ready(out2)
    assert out2.shape == (2, 8, 16, 16)
    err2 = float(jnp.max(jnp.abs(out2 - block_reference(x2, params2, 1))))
    assert err2 < 1e-1, f"mismatch vs reference: {err2}"

    print("KERNEL_OK")
</pallas_src>

<mosaic_0001>
module attributes {stable_mosaic.version = 11 : i64} {
  func.func @kernel(%arg0: i32, %arg1: i32, %arg2: memref<128x128xbf16, #tpu.memory_space<vmem>>, %arg3: memref<128x128xbf16, #tpu.memory_space<vmem>>, %arg4: memref<1x128xf32, #tpu.memory_space<vmem>>, %arg5: memref<128x128xbf16, #tpu.memory_space<vmem>>) attributes {dimension_semantics = [#tpu.dimension_semantics<parallel>, #tpu.dimension_semantics<parallel>], iteration_bounds = array<i64: 1, 1>, scalar_prefetch = 0 : i64, scratch_operands = 0 : i64, tpu.core_type = #tpu.core_type<tc>, window_params = [{transform_indices = @transform_0, window_bounds = array<i64: 128, 128>}, {transform_indices = @transform_1, window_bounds = array<i64: 128, 128>}, {transform_indices = @transform_2, window_bounds = array<i64: 1, 128>}, {transform_indices = @transform_3, window_bounds = array<i64: 128, 128>}]} {
    %c0 = arith.constant 0 : index
    %c0_0 = arith.constant 0 : index
    %0 = vector.load %arg2[%c0, %c0_0] : memref<128x128xbf16, #tpu.memory_space<vmem>>, vector<128x128xbf16>
    %c0_1 = arith.constant 0 : index
    %c0_2 = arith.constant 0 : index
    %1 = vector.load %arg3[%c0_1, %c0_2] : memref<128x128xbf16, #tpu.memory_space<vmem>>, vector<128x128xbf16>
    %cst = arith.constant dense<0.000000e+00> : vector<128x128xf32>
    %2 = tpu.matmul %0, %1, %cst {dimension_numbers = #tpu.dot_dimension_numbers<[1], [0], [0], [1], [0, 0, 1, 1], [], []>} : vector<128x128xbf16>, vector<128x128xbf16>, vector<128x128xf32> -> vector<128x128xf32>
    %c0_3 = arith.constant 0 : index
    %c0_4 = arith.constant 0 : index
    %3 = vector.load %arg4[%c0_3, %c0_4] : memref<1x128xf32, #tpu.memory_space<vmem>>, vector<1x128xf32>
    %4 = vector.broadcast %3 : vector<1x128xf32> to vector<128x128xf32>
    %5 = arith.addf %2, %4 : vector<128x128xf32>
    %cst_5 = arith.constant 0.000000e+00 : f32
    %6 = vector.broadcast %cst_5 : f32 to vector<128x128xf32>
    %7 = arith.maximumf %5, %6 : vector<128x128xf32>
    %8 = arith.truncf %7 : vector<128x128xf32> to vector<128x128xbf16>
    %c0_6 = arith.constant 0 : index
    %c0_7 = arith.constant 0 : index
    %9 = vector.load %arg5[%c0_6, %c0_7] : memref<128x128xbf16, #tpu.memory_space<vmem>>, vector<128x128xbf16>
    tpu.vector_store %arg5[%c0_6, %c0_7], %8 {strides = array<i32>} : memref<128x128xbf16, #tpu.memory_space<vmem>>, vector<128x128xbf16>,
    return
  }
  func.func @transform_0(%arg0: i32, %arg1: i32) -> (i32, i32) {
    %c0_i32 = arith.constant 0 : i32
    %c0_i32_0 = arith.constant 0 : i32
    return %arg0, %c0_i32 : i32, i32
  }
  func.func @transform_1(%arg0: i32, %arg1: i32) -> (i32, i32) {
    %c0_i32 = arith.constant 0 : i32
    %c0_i32_0 = arith.constant 0 : i32
    return %c0_i32, %arg1 : i32, i32
  }
  func.func @transform_2(%arg0: i32, %arg1: i32) -> (i32, i32) {
    %c0_i32 = arith.constant 0 : i32
    %c0_i32_0 = arith.constant 0 : i32
    return %c0_i32, %arg1 : i32, i32
  }
  func.func @transform_3(%arg0: i32, %arg1: i32) -> (i32, i32) {
    %c0_i32 = arith.constant 0 : i32
    return %arg0, %arg1 : i32, i32
  }
}

module attributes {stable_mosaic.version = 11 : i64} {
  func.func @kernel(%arg0: i32, %arg1: i32, %arg2: memref<128x128xbf16, #tpu.memory_space<vmem>>, %arg3: memref<128x128xbf16, #tpu.memory_space<vmem>>, %arg4: memref<1x128xf32, #tpu.memory_space<vmem>>, %arg5: memref<128x128xbf16, #tpu.memory_space<vmem>>) attributes {dimension_semantics = [#tpu.dimension_semantics<parallel>, #tpu.dimension_semantics<parallel>], iteration_bounds = array<i64: 1, 1>, scalar_prefetch = 0 : i64, scratch_operands = 0 : i64, tpu.core_type = #tpu.core_type<tc>, window_params = [{transform_indices = @transform_0, window_bounds = array<i64: 128, 128>}, {transform_indices = @transform_1, window_bounds = array<i64: 128, 128>}, {transform_indices = @transform_2, window_bounds = array<i64: 1, 128>}, {transform_indices = @transform_3, window_bounds = array<i64: 128, 128>}]} {
    %c0 = arith.constant 0 : index
    %c0_0 = arith.constant 0 : index
    %0 = vector.load %arg2[%c0, %c0_0] : memref<128x128xbf16, #tpu.memory_space<vmem>>, vector<128x128xbf16>
    %c0_1 = arith.constant 0 : index
    %c0_2 = arith.constant 0 : index
    %1 = vector.load %arg3[%c0_1, %c0_2] : memref<128x128xbf16, #tpu.memory_space<vmem>>, vector<128x128xbf16>
    %cst = arith.constant dense<0.000000e+00> : vector<128x128xf32>
    %2 = tpu.matmul %0, %1, %cst {dimension_numbers = #tpu.dot_dimension_numbers<[1], [0], [0], [1], [0, 0, 1, 1], [], []>} : vector<128x128xbf16>, vector<128x128xbf16>, vector<128x128xf32> -> vector<128x128xf32>
    %c0_3 = arith.constant 0 : index
    %c0_4 = arith.constant 0 : index
    %3 = vector.load %arg4[%c0_3, %c0_4] : memref<1x128xf32, #tpu.memory_space<vmem>>, vector<1x128xf32>
    %4 = vector.broadcast %3 : vector<1x128xf32> to vector<128x128xf32>
    %5 = arith.addf %2, %4 : vector<128x128xf32>
    %6 = arith.truncf %5 : vector<128x128xf32> to vector<128x128xbf16>
    %c0_5 = arith.constant 0 : index
    %c0_6 = arith.constant 0 : index
    %7 = vector.load %arg5[%c0_5, %c0_6] : memref<128x128xbf16, #tpu.memory_space<vmem>>, vector<128x128xbf16>
    tpu.vector_store %arg5[%c0_5, %c0_6], %6 {strides = array<i32>} : memref<128x128xbf16, #tpu.memory_space<vmem>>, vector<128x128xbf16>,
    return
  }
  func.func @transform_0(%arg0: i32, %arg1: i32) -> (i32, i32) {
    %c0_i32 = arith.constant 0 : i32
    %c0_i32_0 = arith.constant 0 : i32
    return %arg0, %c0_i32 : i32, i32
  }
  func.func @transform_1(%arg0: i32, %arg1: i32) -> (i32, i32) {
    %c0_i32 = arith.constant 0 : i32
    %c0_i32_0 = arith.constant 0 : i32
    return %c0_i32, %arg1 : i32, i32
  }
  func.func @transform_2(%arg0: i32, %arg1: i32) -> (i32, i32) {
    %c0_i32 = arith.constant 0 : i32
    %c0_i32_0 = arith.constant 0 : i32
    return %c0_i32, %arg1 : i32, i32
  }
  func.func @transform_3(%arg0: i32, %arg1: i32) -> (i32, i32) {
    %c0_i32 = arith.constant 0 : i32
    return %arg0, %arg1 : i32, i32
  }
}

module attributes {stable_mosaic.version = 11 : i64} {
  func.func @kernel(%arg0: i32, %arg1: i32, %arg2: memref<128x128xbf16, #tpu.memory_space<vmem>>, %arg3: memref<128x128xbf16, #tpu.memory_space<vmem>>, %arg4: memref<1x128xf32, #tpu.memory_space<vmem>>, %arg5: memref<128x128xbf16, #tpu.memory_space<vmem>>, %arg6: memref<128x128xf32, #tpu.memory_space<vmem>>) attributes {dimension_semantics = [#tpu.dimension_semantics<parallel>, #tpu.dimension_semantics<parallel>], iteration_bounds = array<i64: 1, 1>, scalar_prefetch = 0 : i64, scratch_operands = 0 : i64, tpu.core_type = #tpu.core_type<tc>, window_params = [{transform_indices = @transform_0, window_bounds = array<i64: 128, 128>}, {transform_indices = @transform_1, window_bounds = array<i64: 128, 128>}, {transform_indices = @transform_2, window_bounds = array<i64: 1, 128>}, {transform_indices = @transform_3, window_bounds = array<i64: 128, 128>}, {transform_indices = @transform_4, window_bounds = array<i64: 128, 128>}]} {
    %c0 = arith.constant 0 : index
    %c0_0 = arith.constant 0 : index
    %0 = vector.load %arg2[%c0, %c0_0] : memref<128x128xbf16, #tpu.memory_space<vmem>>, vector<128x128xbf16>
    %c0_1 = arith.constant 0 : index
    %c0_2 = arith.constant 0 : index
    %1 = vector.load %arg3[%c0_1, %c0_2] : memref<128x128xbf16, #tpu.memory_space<vmem>>, vector<128x128xbf16>
    %cst = arith.constant dense<0.000000e+00> : vector<128x128xf32>
    %2 = tpu.matmul %0, %1, %cst {dimension_numbers = #tpu.dot_dimension_numbers<[1], [0], [0], [1], [0, 0, 1, 1], [], []>} : vector<128x128xbf16>, vector<128x128xbf16>, vector<128x128xf32> -> vector<128x128xf32>
    %c0_3 = arith.constant 0 : index
    %c0_4 = arith.constant 0 : index
    %3 = vector.load %arg4[%c0_3, %c0_4] : memref<1x128xf32, #tpu.memory_space<vmem>>, vector<1x128xf32>
    %4 = vector.broadcast %3 : vector<1x128xf32> to vector<128x128xf32>
    %5 = arith.addf %2, %4 : vector<128x128xf32>
    %c0_5 = arith.constant 0 : index
    %c0_6 = arith.constant 0 : index
    %6 = vector.load %arg5[%c0_5, %c0_6] : memref<128x128xbf16, #tpu.memory_space<vmem>>, vector<128x128xbf16>
    %7 = arith.extf %6 : vector<128x128xbf16> to vector<128x128xf32>
    %8 = arith.addf %5, %7 : vector<128x128xf32>
    %cst_7 = arith.constant 0.000000e+00 : f32
    %9 = vector.broadcast %cst_7 : f32 to vector<128x128xf32>
    %10 = arith.maximumf %8, %9 : vector<128x128xf32>
    %c0_8 = arith.constant 0 : index
    %c0_9 = arith.constant 0 : index
    %11 = vector.load %arg6[%c0_8, %c0_9] : memref<128x128xf32, #tpu.memory_space<vmem>>, vector<128x128xf32>
    tpu.vector_store %arg6[%c0_8, %c0_9], %10 {strides = array<i32>} : memref<128x128xf32, #tpu.memory_space<vmem>>, vector<128x128xf32>,
    return
  }
  func.func @transform_0(%arg0: i32, %arg1: i32) -> (i32, i32) {
    %c0_i32 = arith.constant 0 : i32
    %c0_i32_0 = arith.constant 0 : i32
    return %arg0, %c0_i32 : i32, i32
  }
  func.func @transform_1(%arg0: i32, %arg1: i32) -> (i32, i32) {
    %c0_i32 = arith.constant 0 : i32
    %c0_i32_0 = arith.constant 0 : i32
    return %c0_i32, %arg1 : i32, i32
  }
  func.func @transform_2(%arg0: i32, %arg1: i32) -> (i32, i32) {
    %c0_i32 = arith.constant 0 : i32
    %c0_i32_0 = arith.constant 0 : i32
    return %c0_i32, %arg1 : i32, i32
  }
  func.func @transform_3(%arg0: i32, %arg1: i32) -> (i32, i32) {
    %c0_i32 = arith.constant 0 : i32
    return %arg0, %arg1 : i32, i32
  }
  func.func @transform_4(%arg0: i32, %arg1: i32) -> (i32, i32) {
    %c0_i32 = arith.constant 0 : i32
    return %arg0, %arg1 : i32, i32
  }
}

</mosaic_0001>

<llo_original>
// kernel: _lambda_.4
$region0: #{_lambda_.4}
  #allocation0 [shape = 'u32[]', space=smem, size = 0x4, offset = 0x4, fixed_abs, tag = 'smem constant byte address 0x4 - core index']
  #allocation1 [shape = 'u32[72,128]{1,0:T(1,128)}', space=vmem, size = 0x9000, scoped, tag = 'internal scratch']
  %s0 = inlined_call_operand.vmem [shape: bf16[128,128], index: 0, kind: input, shape index: {}]
  %s1 = inlined_call_operand.vmem [shape: bf16[128,128], index: 1, kind: input, shape index: {}]
  %s2 = inlined_call_operand.vmem [shape: f32[1,128], index: 2, kind: input, shape index: {}]
  %s3 = inlined_call_operand.vmem [shape: bf16[128,128], index: 3, kind: output, shape index: {}]
  %s4 = sld [smem:[#allocation0]]
  $region22: #{_lambda_.4} parent=0
    _
  %s6 = ssub.s32 1, %s4
  %s7 = scalar_select 0, %s6, %s4
  // Predicated region
  $region2: #{_lambda_.4} parent=0 // pred_check
    _
  $region3: #{_lambda_.4} parent=0 // pred_check_branch
    %9 = sbr.rel (0) target = $region5
  $region4: #{_lambda_.4} parent=0 // pred_region
    _
  $region5: #{_lambda_.4} parent=0 // pred_fallthru
    _
  // Predicated region
  $region6: #{_lambda_.4} parent=0 // pred_check
    _
  $region7: #{_lambda_.4} parent=0 // pred_check_branch
    %11 = sbr.rel (0) target = $region9
  $region8: #{_lambda_.4} parent=0 // pred_region
    _
  $region9: #{_lambda_.4} parent=0 // pred_fallthru
    _
  // Predicated region
  $region10: #{_lambda_.4} parent=0 // pred_check
    _
  $region11: #{_lambda_.4} parent=0 // pred_check_branch
    %13 = sbr.rel (0) target = $region13
  $region12: #{_lambda_.4} parent=0 // pred_region
    _
  $region13: #{_lambda_.4} parent=0 // pred_fallthru
    _
  %v14 = vld [vmem:[%s0] sm:$0xf]
  %v15 = vld [vmem:[%s0 + $0x4] sm:$0xf]
  %v16 = vld [vmem:[%s0 + $0x8] sm:$0xf]
  %v17 = vld [vmem:[%s0 + $0xc] sm:$0xf]
  %v18 = vld [vmem:[%s0 + $0x10] sm:$0xf]
  %v19 = vld [vmem:[%s0 + $0x14] sm:$0xf]
  %v20 = vld [vmem:[%s0 + $0x18] sm:$0xf]
  %v21 = vld [vmem:[%s0 + $0x1c] sm:$0xf]
  %v22 = vld [vmem:[%s0 + $0x20] sm:$0xf]
  %v23 = vld [vmem:[%s0 + $0x24] sm:$0xf]
  %v24 = vld [vmem:[%s0 + $0x28] sm:$0xf]
  %v25 = vld [vmem:[%s0 + $0x2c] sm:$0xf]
  %v26 = vld [vmem:[%s0 + $0x30] sm:$0xf]
  %v27 = vld [vmem:[%s0 + $0x34] sm:$0xf]
  %v28 = vld [vmem:[%s0 + $0x38] sm:$0xf]
  %v29 = vld [vmem:[%s0 + $0x3c] sm:$0xf]
  %v30 = vld [vmem:[%s1] sm:$0xf]
  %v31 = vld [vmem:[%s1 + $0x4] sm:$0xf]
  %v32 = vld [vmem:[%s1 + $0x8] sm:$0xf]
  %v33 = vld [vmem:[%s1 + $0xc] sm:$0xf]
  %v34 = vld [vmem:[%s1 + $0x10] sm:$0xf]
  %v35 = vld [vmem:[%s1 + $0x14] sm:$0xf]
  %v36 = vld [vmem:[%s1 + $0x18] sm:$0xf]
  %v37 = vld [vmem:[%s1 + $0x1c] sm:$0xf]
  %v38 = vld [vmem:[%s1 + $0x20] sm:$0xf]
  %v39 = vld [vmem:[%s1 + $0x24] sm:$0xf]
  %v40 = vld [vmem:[%s1 + $0x28] sm:$0xf]
  %v41 = vld [vmem:[%s1 + $0x2c] sm:$0xf]
  %v42 = vld [vmem:[%s1 + $0x30] sm:$0xf]
  %v43 = vld [vmem:[%s1 + $0x34] sm:$0xf]
  %v44 = vld [vmem:[%s1 + $0x38] sm:$0xf]
  %v45 = vld [vmem:[%s1 + $0x3c] sm:$0xf]
  %v46 = vld [vmem:[%s2] sm:$0x1]
  %v48 = vperm.slane %v46, 0
  %v66 = vunpack.c.l.b16 %v14
  %v67 = vunpack.c.l.b16 %v15
  %v68 = vunpack.c.l.b16 %v16
  %v69 = vunpack.c.l.b16 %v17
  %v70 = vunpack.c.l.b16 %v18
  %v71 = vunpack.c.l.b16 %v19
  %v72 = vunpack.c.l.b16 %v20
  %v73 = vunpack.c.l.b16 %v21
  %v74 = vunpack.c.l.b16 %v22
  %v75 = vunpack.c.l.b16 %v23
  %v76 = vunpack.c.l.b16 %v24
  %v77 = vunpack.c.l.b16 %v25
  %v78 = vunpack.c.l.b16 %v26
  %v79 = vunpack.c.l.b16 %v27
  %v80 = vunpack.c.l.b16 %v28
  %v81 = vunpack.c.l.b16 %v29
  %v82 = vpack.c.b16 %v67, %v66
  %v83 = vpack.c.b16 %v69, %v68
  %v84 = vpack.c.b16 %v71, %v70
  %v85 = vpack.c.b16 %v73, %v72
  %v86 = vpack.c.b16 %v75, %v74
  %v87 = vpack.c.b16 %v77, %v76
  %v88 = vpack.c.b16 %v79, %v78
  %v89 = vpack.c.b16 %v81, %v80
  %v114 = vunpack.c.l.b16 %v30
  %v115 = vunpack.c.l.b16 %v31
  %v116 = vunpack.c.l.b16 %v32
  %v117 = vunpack.c.l.b16 %v33
  %v118 = vunpack.c.l.b16 %v34
  %v119 = vunpack.c.l.b16 %v35
  %v120 = vunpack.c.l.b16 %v36
  %v121 = vunpack.c.l.b16 %v37
  %v122 = vunpack.c.l.b16 %v38
  %v123 = vunpack.c.l.b16 %v39
  %v124 = vunpack.c.l.b16 %v40
  %v125 = vunpack.c.l.b16 %v41
  %v126 = vunpack.c.l.b16 %v42
  %v127 = vunpack.c.l.b16 %v43
  %v128 = vunpack.c.l.b16 %v44
  %v129 = vunpack.c.l.b16 %v45
  %v130 = vpack.c.b16 %v115, %v114
  %v131 = vpack.c.b16 %v117, %v116
  %v132 = vpack.c.b16 %v119, %v118
  %v133 = vpack.c.b16 %v121, %v120
  %v134 = vpack.c.b16 %v123, %v122
  %v135 = vpack.c.b16 %v125, %v124
  %v136 = vpack.c.b16 %v127, %v126
  %v137 = vpack.c.b16 %v129, %v128
  %146 = vmatpush.bf16.msra.mxu0 %v137
  %147 = vmatpush.bf16.msra.mxu0 %v136
  %148 = vmatpush.bf16.msra.mxu0 %v135
  %149 = vmatpush.bf16.msra.mxu0 %v134
  %150 = vmatpush.bf16.msra.mxu0 %v133
  %151 = vmatpush.bf16.msra.mxu0 %v132
  %152 = vmatpush.bf16.msra.mxu0 %v131
  %153 = vmatpush.bf16.msra.mxu0 %v130
  %154 = vmatmul.bf16.gmra.mxu0 %v82
  %v155 = vpop.f32.mrf.mxu0
  %v156 = vadd.f32 %v48, %v155
  %v157 = vpop.f32.mrf.mxu0
  %v158 = vadd.f32 %v48, %v157
  %159 = vmatmul.bf16.gmra.mxu0 %v83
  %v160 = vpop.f32.mrf.mxu0
  %v161 = vadd.f32 %v48, %v160
  %v162 = vpop.f32.mrf.mxu0
  %v163 = vadd.f32 %v48, %v162
  %164 = vmatmul.bf16.gmra.mxu0 %v84
  %v165 = vpop.f32.mrf.mxu0
  %v166 = vadd.f32 %v48, %v165
  %v167 = vpop.f32.mrf.mxu0
  %v168 = vadd.f32 %v48, %v167
  %169 = vmatmul.bf16.gmra.mxu0 %v85
  %v170 = vpop.f32.mrf.mxu0
  %v171 = vadd.f32 %v48, %v170
  %v172 = vpop.f32.mrf.mxu0
  %v173 = vadd.f32 %v48, %v172
  %174 = vmatmul.bf16.gmra.mxu0 %v86
  %v175 = vpop.f32.mrf.mxu0
  %v176 = vadd.f32 %v48, %v175
  %v177 = vpop.f32.mrf.mxu0
  %v178 = vadd.f32 %v48, %v177
  %179 = vmatmul.bf16.gmra.mxu0 %v87
  %v180 = vpop.f32.mrf.mxu0
  %v181 = vadd.f32 %v48, %v180
  %v182 = vpop.f32.mrf.mxu0
  %v183 = vadd.f32 %v48, %v182
  %184 = vmatmul.bf16.gmra.mxu0 %v88
  %v185 = vpop.f32.mrf.mxu0
  %v186 = vadd.f32 %v48, %v185
  %v187 = vpop.f32.mrf.mxu0
  %v188 = vadd.f32 %v48, %v187
  %189 = vmatmul.bf16.gmra.mxu0 %v89
  %v190 = vpop.f32.mrf.mxu0
  %v191 = vadd.f32 %v48, %v190
  %v192 = vpop.f32.mrf.mxu0
  %v193 = vadd.f32 %v48, %v192
  %194 = vdwg.mxu0
  %v195 = vpack.c.bf16 %v156, %v156
  %v196 = vpack.c.bf16 %v158, %v158
  %v197 = vpack.c.bf16 %v161, %v161
  %v198 = vpack.c.bf16 %v163, %v163
  %v199 = vpack.c.bf16 %v166, %v166
  %v200 = vpack.c.bf16 %v168, %v168
  %v201 = vpack.c.bf16 %v171, %v171
  %v202 = vpack.c.bf16 %v173, %v173
  %v203 = vpack.c.bf16 %v176, %v176
  %v204 = vpack.c.bf16 %v178, %v178
  %v205 = vpack.c.bf16 %v181, %v181
  %v206 = vpack.c.bf16 %v183, %v183
  %v207 = vpack.c.bf16 %v186, %v186
  %v208 = vpack.c.bf16 %v188, %v188
  %v209 = vpack.c.bf16 %v191, %v191
  %v210 = vpack.c.bf16 %v193, %v193
  %211 = vst [vmem:[%s3] sm:$0xf] %v195
  %212 = vst [vmem:[%s3 + $0x4] sm:$0xf] %v196
  %213 = vst [vmem:[%s3 + $0x8] sm:$0xf] %v197
  %214 = vst [vmem:[%s3 + $0xc] sm:$0xf] %v198
  %215 = vst [vmem:[%s3 + $0x10] sm:$0xf] %v199
  %216 = vst [vmem:[%s3 + $0x14] sm:$0xf] %v200
  %217 = vst [vmem:[%s3 + $0x18] sm:$0xf] %v201
  %218 = vst [vmem:[%s3 + $0x1c] sm:$0xf] %v202
  %219 = vst [vmem:[%s3 + $0x20] sm:$0xf] %v203
  %220 = vst [vmem:[%s3 + $0x24] sm:$0xf] %v204
  %221 = vst [vmem:[%s3 + $0x28] sm:$0xf] %v205
  %222 = vst [vmem:[%s3 + $0x2c] sm:$0xf] %v206
  %223 = vst [vmem:[%s3 + $0x30] sm:$0xf] %v207
  %224 = vst [vmem:[%s3 + $0x34] sm:$0xf] %v208
  %225 = vst [vmem:[%s3 + $0x38] sm:$0xf] %v209
  %226 = vst [vmem:[%s3 + $0x3c] sm:$0xf] %v210
  // Predicated region
  $region14: #{_lambda_.4} parent=0 // pred_check
    _
  $region15: #{_lambda_.4} parent=0 // pred_check_branch
    %228 = sbr.rel (0) target = $region17
  $region16: #{_lambda_.4} parent=0 // pred_region
    _
  $region17: #{_lambda_.4} parent=0 // pred_fallthru
    _
  // Predicated region
  $region18: #{_lambda_.4} parent=0 // pred_check
    _
  $region19: #{_lambda_.4} parent=0 // pred_check_branch
    %230 = sbr.rel (0) target = $region21
  $region20: #{_lambda_.4} parent=0 // pred_region
    _
  $region21: #{_lambda_.4} parent=0 // pred_fallthru
    _

// kernel: _lambda_.3
$region0: #{_lambda_.3}
  #allocation0 [shape = 'u32[]', space=smem, size = 0x4, offset = 0x4, fixed_abs, tag = 'smem constant byte address 0x4 - core index']
  #allocation1 [shape = 'u32[72,128]{1,0:T(1,128)}', space=vmem, size = 0x9000, scoped, tag = 'internal scratch']
  %s0 = inlined_call_operand.vmem [shape: bf16[128,128], index: 0, kind: input, shape index: {}]
  %s1 = inlined_call_operand.vmem [shape: bf16[128,128], index: 1, kind: input, shape index: {}]
  %s2 = inlined_call_operand.vmem [shape: f32[1,128], index: 2, kind: input, shape index: {}]
  %s3 = inlined_call_operand.vmem [shape: bf16[128,128], index: 3, kind: output, shape index: {}]
  %s4 = sld [smem:[#allocation0]]
  $region22: #{_lambda_.3} parent=0
    _
  %s6 = ssub.s32 1, %s4
  %s7 = scalar_select 0, %s6, %s4
  // Predicated region
  $region2: #{_lambda_.3} parent=0 // pred_check
    _
  $region3: #{_lambda_.3} parent=0 // pred_check_branch
    %9 = sbr.rel (0) target = $region5
  $region4: #{_lambda_.3} parent=0 // pred_region
    _
  $region5: #{_lambda_.3} parent=0 // pred_fallthru
    _
  // Predicated region
  $region6: #{_lambda_.3} parent=0 // pred_check
    _
  $region7: #{_lambda_.3} parent=0 // pred_check_branch
    %11 = sbr.rel (0) target = $region9
  $region8: #{_lambda_.3} parent=0 // pred_region
    _
  $region9: #{_lambda_.3} parent=0 // pred_fallthru
    _
  // Predicated region
  $region10: #{_lambda_.3} parent=0 // pred_check
    _
  $region11: #{_lambda_.3} parent=0 // pred_check_branch
    %13 = sbr.rel (0) target = $region13
  $region12: #{_lambda_.3} parent=0 // pred_region
    _
  $region13: #{_lambda_.3} parent=0 // pred_fallthru
    _
  %v14 = vld [vmem:[%s0] sm:$0xf]
  %v15 = vld [vmem:[%s0 + $0x4] sm:$0xf]
  %v16 = vld [vmem:[%s0 + $0x8] sm:$0xf]
  %v17 = vld [vmem:[%s0 + $0xc] sm:$0xf]
  %v18 = vld [vmem:[%s0 + $0x10] sm:$0xf]
  %v19 = vld [vmem:[%s0 + $0x14] sm:$0xf]
  %v20 = vld [vmem:[%s0 + $0x18] sm:$0xf]
  %v21 = vld [vmem:[%s0 + $0x1c] sm:$0xf]
  %v22 = vld [vmem:[%s0 + $0x20] sm:$0xf]
  %v23 = vld [vmem:[%s0 + $0x24] sm:$0xf]
  %v24 = vld [vmem:[%s0 + $0x28] sm:$0xf]
  %v25 = vld [vmem:[%s0 + $0x2c] sm:$0xf]
  %v26 = vld [vmem:[%s0 + $0x30] sm:$0xf]
  %v27 = vld [vmem:[%s0 + $0x34] sm:$0xf]
  %v28 = vld [vmem:[%s0 + $0x38] sm:$0xf]
  %v29 = vld [vmem:[%s0 + $0x3c] sm:$0xf]
  %v30 = vld [vmem:[%s1] sm:$0xf]
  %v31 = vld [vmem:[%s1 + $0x4] sm:$0xf]
  %v32 = vld [vmem:[%s1 + $0x8] sm:$0xf]
  %v33 = vld [vmem:[%s1 + $0xc] sm:$0xf]
  %v34 = vld [vmem:[%s1 + $0x10] sm:$0xf]
  %v35 = vld [vmem:[%s1 + $0x14] sm:$0xf]
  %v36 = vld [vmem:[%s1 + $0x18] sm:$0xf]
  %v37 = vld [vmem:[%s1 + $0x1c] sm:$0xf]
  %v38 = vld [vmem:[%s1 + $0x20] sm:$0xf]
  %v39 = vld [vmem:[%s1 + $0x24] sm:$0xf]
  %v40 = vld [vmem:[%s1 + $0x28] sm:$0xf]
  %v41 = vld [vmem:[%s1 + $0x2c] sm:$0xf]
  %v42 = vld [vmem:[%s1 + $0x30] sm:$0xf]
  %v43 = vld [vmem:[%s1 + $0x34] sm:$0xf]
  %v44 = vld [vmem:[%s1 + $0x38] sm:$0xf]
  %v45 = vld [vmem:[%s1 + $0x3c] sm:$0xf]
  %v46 = vld [vmem:[%s2] sm:$0x1]
  %v48 = vperm.slane %v46, 0
  %v66 = vunpack.c.l.b16 %v14
  %v67 = vunpack.c.l.b16 %v15
  %v68 = vunpack.c.l.b16 %v16
  %v69 = vunpack.c.l.b16 %v17
  %v70 = vunpack.c.l.b16 %v18
  %v71 = vunpack.c.l.b16 %v19
  %v72 = vunpack.c.l.b16 %v20
  %v73 = vunpack.c.l.b16 %v21
  %v74 = vunpack.c.l.b16 %v22
  %v75 = vunpack.c.l.b16 %v23
  %v76 = vunpack.c.l.b16 %v24
  %v77 = vunpack.c.l.b16 %v25
  %v78 = vunpack.c.l.b16 %v26
  %v79 = vunpack.c.l.b16 %v27
  %v80 = vunpack.c.l.b16 %v28
  %v81 = vunpack.c.l.b16 %v29
  %v82 = vpack.c.b16 %v67, %v66
  %v83 = vpack.c.b16 %v69, %v68
  %v84 = vpack.c.b16 %v71, %v70
  %v85 = vpack.c.b16 %v73, %v72
  %v86 = vpack.c.b16 %v75, %v74
  %v87 = vpack.c.b16 %v77, %v76
  %v88 = vpack.c.b16 %v79, %v78
  %v89 = vpack.c.b16 %v81, %v80
  %v114 = vunpack.c.l.b16 %v30
  %v115 = vunpack.c.l.b16 %v31
  %v116 = vunpack.c.l.b16 %v32
  %v117 = vunpack.c.l.b16 %v33
  %v118 = vunpack.c.l.b16 %v34
  %v119 = vunpack.c.l.b16 %v35
  %v120 = vunpack.c.l.b16 %v36
  %v121 = vunpack.c.l.b16 %v37
  %v122 = vunpack.c.l.b16 %v38
  %v123 = vunpack.c.l.b16 %v39
  %v124 = vunpack.c.l.b16 %v40
  %v125 = vunpack.c.l.b16 %v41
  %v126 = vunpack.c.l.b16 %v42
  %v127 = vunpack.c.l.b16 %v43
  %v128 = vunpack.c.l.b16 %v44
  %v129 = vunpack.c.l.b16 %v45
  %v130 = vpack.c.b16 %v115, %v114
  %v131 = vpack.c.b16 %v117, %v116
  %v132 = vpack.c.b16 %v119, %v118
  %v133 = vpack.c.b16 %v121, %v120
  %v134 = vpack.c.b16 %v123, %v122
  %v135 = vpack.c.b16 %v125, %v124
  %v136 = vpack.c.b16 %v127, %v126
  %v137 = vpack.c.b16 %v129, %v128
  %146 = vmatpush.bf16.msra.mxu0 %v137
  %147 = vmatpush.bf16.msra.mxu0 %v136
  %148 = vmatpush.bf16.msra.mxu0 %v135
  %149 = vmatpush.bf16.msra.mxu0 %v134
  %150 = vmatpush.bf16.msra.mxu0 %v133
  %151 = vmatpush.bf16.msra.mxu0 %v132
  %152 = vmatpush.bf16.msra.mxu0 %v131
  %153 = vmatpush.bf16.msra.mxu0 %v130
  %154 = vmatmul.bf16.gmra.mxu0 %v82
  %v155 = vpop.f32.mrf.mxu0
  %v156 = vadd.f32 %v48, %v155
  %v157 = vpop.f32.mrf.mxu0
  %v158 = vadd.f32 %v48, %v157
  %159 = vmatmul.bf16.gmra.mxu0 %v83
  %v160 = vpop.f32.mrf.mxu0
  %v161 = vadd.f32 %v48, %v160
  %v162 = vpop.f32.mrf.mxu0
  %v163 = vadd.f32 %v48, %v162
  %164 = vmatmul.bf16.gmra.mxu0 %v84
  %v165 = vpop.f32.mrf.mxu0
  %v166 = vadd.f32 %v48, %v165
  %v167 = vpop.f32.mrf.mxu0
  %v168 = vadd.f32 %v48, %v167
  %169 = vmatmul.bf16.gmra.mxu0 %v85
  %v170 = vpop.f32.mrf.mxu0
  %v171 = vadd.f32 %v48, %v170
  %v172 = vpop.f32.mrf.mxu0
  %v173 = vadd.f32 %v48, %v172
  %174 = vmatmul.bf16.gmra.mxu0 %v86
  %v175 = vpop.f32.mrf.mxu0
  %v176 = vadd.f32 %v48, %v175
  %v177 = vpop.f32.mrf.mxu0
  %v178 = vadd.f32 %v48, %v177
  %179 = vmatmul.bf16.gmra.mxu0 %v87
  %v180 = vpop.f32.mrf.mxu0
  %v181 = vadd.f32 %v48, %v180
  %v182 = vpop.f32.mrf.mxu0
  %v183 = vadd.f32 %v48, %v182
  %184 = vmatmul.bf16.gmra.mxu0 %v88
  %v185 = vpop.f32.mrf.mxu0
  %v186 = vadd.f32 %v48, %v185
  %v187 = vpop.f32.mrf.mxu0
  %v188 = vadd.f32 %v48, %v187
  %189 = vmatmul.bf16.gmra.mxu0 %v89
  %v190 = vpop.f32.mrf.mxu0
  %v191 = vadd.f32 %v48, %v190
  %v192 = vpop.f32.mrf.mxu0
  %v193 = vadd.f32 %v48, %v192
  %194 = vdwg.mxu0
  %v195 = vmax.f32 %v156, 0.0
  %v196 = vmax.f32 %v158, 0.0
  %v197 = vmax.f32 %v161, 0.0
  %v198 = vmax.f32 %v163, 0.0
  %v199 = vmax.f32 %v166, 0.0
  %v200 = vmax.f32 %v168, 0.0
  %v201 = vmax.f32 %v171, 0.0
  %v202 = vmax.f32 %v173, 0.0
  %v203 = vmax.f32 %v176, 0.0
  %v204 = vmax.f32 %v178, 0.0
  %v205 = vmax.f32 %v181, 0.0
  %v206 = vmax.f32 %v183, 0.0
  %v207 = vmax.f32 %v186, 0.0
  %v208 = vmax.f32 %v188, 0.0
  %v209 = vmax.f32 %v191, 0.0
  %v210 = vmax.f32 %v193, 0.0
  %v211 = vpack.c.bf16 %v195, %v195
  %v212 = vpack.c.bf16 %v196, %v196
  %v213 = vpack.c.bf16 %v197, %v197
  %v214 = vpack.c.bf16 %v198, %v198
  %v215 = vpack.c.bf16 %v199, %v199
  %v216 = vpack.c.bf16 %v200, %v200
  %v217 = vpack.c.bf16 %v201, %v201
  %v218 = vpack.c.bf16 %v202, %v202
  %v219 = vpack.c.bf16 %v203, %v203
  %v220 = vpack.c.bf16 %v204, %v204
  %v221 = vpack.c.bf16 %v205, %v205
  %v222 = vpack.c.bf16 %v206, %v206
  %v223 = vpack.c.bf16 %v207, %v207
  %v224 = vpack.c.bf16 %v208, %v208
  %v225 = vpack.c.bf16 %v209, %v209
  %v226 = vpack.c.bf16 %v210, %v210
  %227 = vst [vmem:[%s3] sm:$0xf] %v211
  %228 = vst [vmem:[%s3 + $0x4] sm:$0xf] %v212
  %229 = vst [vmem:[%s3 + $0x8] sm:$0xf] %v213
  %230 = vst [vmem:[%s3 + $0xc] sm:$0xf] %v214
  %231 = vst [vmem:[%s3 + $0x10] sm:$0xf] %v215
  %232 = vst [vmem:[%s3 + $0x14] sm:$0xf] %v216
  %233 = vst [vmem:[%s3 + $0x18] sm:$0xf] %v217
  %234 = vst [vmem:[%s3 + $0x1c] sm:$0xf] %v218
  %235 = vst [vmem:[%s3 + $0x20] sm:$0xf] %v219
  %236 = vst [vmem:[%s3 + $0x24] sm:$0xf] %v220
  %237 = vst [vmem:[%s3 + $0x28] sm:$0xf] %v221
  %238 = vst [vmem:[%s3 + $0x2c] sm:$0xf] %v222
  %239 = vst [vmem:[%s3 + $0x30] sm:$0xf] %v223
  %240 = vst [vmem:[%s3 + $0x34] sm:$0xf] %v224
  %241 = vst [vmem:[%s3 + $0x38] sm:$0xf] %v225
  %242 = vst [vmem:[%s3 + $0x3c] sm:$0xf] %v226
  // Predicated region
  $region14: #{_lambda_.3} parent=0 // pred_check
    _
  $region15: #{_lambda_.3} parent=0 // pred_check_branch
    %244 = sbr.rel (0) target = $region17
  $region16: #{_lambda_.3} parent=0 // pred_region
    _
  $region17: #{_lambda_.3} parent=0 // pred_fallthru
    _
  // Predicated region
  $region18: #{_lambda_.3} parent=0 // pred_check
    _
  $region19: #{_lambda_.3} parent=0 // pred_check_branch
    %246 = sbr.rel (0) target = $region21
  $region20: #{_lambda_.3} parent=0 // pred_region
    _
  $region21: #{_lambda_.3} parent=0 // pred_fallthru
    _

// kernel: _lambda_.5
$region0: #{_lambda_.5}
  #allocation0 [shape = 'u32[]', space=smem, size = 0x4, offset = 0x4, fixed_abs, tag = 'smem constant byte address 0x4 - core index']
  #allocation1 [shape = 'u32[72,128]{1,0:T(1,128)}', space=vmem, size = 0x9000, scoped, tag = 'internal scratch']
  %s0 = inlined_call_operand.vmem [shape: bf16[128,128], index: 0, kind: input, shape index: {}]
  %s1 = inlined_call_operand.vmem [shape: bf16[128,128], index: 1, kind: input, shape index: {}]
  %s2 = inlined_call_operand.vmem [shape: f32[1,128], index: 2, kind: input, shape index: {}]
  %s3 = inlined_call_operand.vmem [shape: bf16[128,128], index: 3, kind: input, shape index: {}]
  %s4 = inlined_call_operand.vmem [shape: f32[128,128], index: 4, kind: output, shape index: {}]
  %s5 = sld [smem:[#allocation0]]
  $region26: #{_lambda_.5} parent=0
    _
  %s7 = ssub.s32 1, %s5
  %s8 = scalar_select 0, %s7, %s5
  // Predicated region
  $region2: #{_lambda_.5} parent=0 // pred_check
    _
  $region3: #{_lambda_.5} parent=0 // pred_check_branch
    %10 = sbr.rel (0) target = $region5
  $region4: #{_lambda_.5} parent=0 // pred_region
    _
  $region5: #{_lambda_.5} parent=0 // pred_fallthru
    _
  // Predicated region
  $region6: #{_lambda_.5} parent=0 // pred_check
    _
  $region7: #{_lambda_.5} parent=0 // pred_check_branch
    %12 = sbr.rel (0) target = $region9
  $region8: #{_lambda_.5} parent=0 // pred_region
    _
  $region9: #{_lambda_.5} parent=0 // pred_fallthru
    _
  // Predicated region
  $region10: #{_lambda_.5} parent=0 // pred_check
    _
  $region11: #{_lambda_.5} parent=0 // pred_check_branch
    %14 = sbr.rel (0) target = $region13
  $region12: #{_lambda_.5} parent=0 // pred_region
    _
  $region13: #{_lambda_.5} parent=0 // pred_fallthru
    _
  // Predicated region
  $region14: #{_lambda_.5} parent=0 // pred_check
    _
  $region15: #{_lambda_.5} parent=0 // pred_check_branch
    %16 = sbr.rel (0) target = $region17
  $region16: #{_lambda_.5} parent=0 // pred_region
    _
  $region17: #{_lambda_.5} parent=0 // pred_fallthru
    _
  %v17 = vld [vmem:[%s0] sm:$0xf]
  %v18 = vld [vmem:[%s0 + $0x4] sm:$0xf]
  %v19 = vld [vmem:[%s0 + $0x8] sm:$0xf]
  %v20 = vld [vmem:[%s0 + $0xc] sm:$0xf]
  %v21 = vld [vmem:[%s0 + $0x10] sm:$0xf]
  %v22 = vld [vmem:[%s0 + $0x14] sm:$0xf]
  %v23 = vld [vmem:[%s0 + $0x18] sm:$0xf]
  %v24 = vld [vmem:[%s0 + $0x1c] sm:$0xf]
  %v25 = vld [vmem:[%s0 + $0x20] sm:$0xf]
  %v26 = vld [vmem:[%s0 + $0x24] sm:$0xf]
  %v27 = vld [vmem:[%s0 + $0x28] sm:$0xf]
  %v28 = vld [vmem:[%s0 + $0x2c] sm:$0xf]
  %v29 = vld [vmem:[%s0 + $0x30] sm:$0xf]
  %v30 = vld [vmem:[%s0 + $0x34] sm:$0xf]
  %v31 = vld [vmem:[%s0 + $0x38] sm:$0xf]
  %v32 = vld [vmem:[%s0 + $0x3c] sm:$0xf]
  %v33 = vld [vmem:[%s1] sm:$0xf]
  %v34 = vld [vmem:[%s1 + $0x4] sm:$0xf]
  %v35 = vld [vmem:[%s1 + $0x8] sm:$0xf]
  %v36 = vld [vmem:[%s1 + $0xc] sm:$0xf]
  %v37 = vld [vmem:[%s1 + $0x10] sm:$0xf]
  %v38 = vld [vmem:[%s1 + $0x14] sm:$0xf]
  %v39 = vld [vmem:[%s1 + $0x18] sm:$0xf]
  %v40 = vld [vmem:[%s1 + $0x1c] sm:$0xf]
  %v41 = vld [vmem:[%s1 + $0x20] sm:$0xf]
  %v42 = vld [vmem:[%s1 + $0x24] sm:$0xf]
  %v43 = vld [vmem:[%s1 + $0x28] sm:$0xf]
  %v44 = vld [vmem:[%s1 + $0x2c] sm:$0xf]
  %v45 = vld [vmem:[%s1 + $0x30] sm:$0xf]
  %v46 = vld [vmem:[%s1 + $0x34] sm:$0xf]
  %v47 = vld [vmem:[%s1 + $0x38] sm:$0xf]
  %v48 = vld [vmem:[%s1 + $0x3c] sm:$0xf]
  %v49 = vld [vmem:[%s2] sm:$0x1]
  %v51 = vperm.slane %v49, 0
  %v69 = vunpack.c.l.b16 %v17
  %v70 = vunpack.c.l.b16 %v18
  %v71 = vunpack.c.l.b16 %v19
  %v72 = vunpack.c.l.b16 %v20
  %v73 = vunpack.c.l.b16 %v21
  %v74 = vunpack.c.l.b16 %v22
  %v75 = vunpack.c.l.b16 %v23
  %v76 = vunpack.c.l.b16 %v24
  %v77 = vunpack.c.l.b16 %v25
  %v78 = vunpack.c.l.b16 %v26
  %v79 = vunpack.c.l.b16 %v27
  %v80 = vunpack.c.l.b16 %v28
  %v81 = vunpack.c.l.b16 %v29
  %v82 = vunpack.c.l.b16 %v30
  %v83 = vunpack.c.l.b16 %v31
  %v84 = vunpack.c.l.b16 %v32
  %v85 = vpack.c.b16 %v70, %v69
  %v86 = vpack.c.b16 %v72, %v71
  %v87 = vpack.c.b16 %v74, %v73
  %v88 = vpack.c.b16 %v76, %v75
  %v89 = vpack.c.b16 %v78, %v77
  %v90 = vpack.c.b16 %v80, %v79
  %v91 = vpack.c.b16 %v82, %v81
  %v92 = vpack.c.b16 %v84, %v83
  %v117 = vunpack.c.l.b16 %v33
  %v118 = vunpack.c.l.b16 %v34
  %v119 = vunpack.c.l.b16 %v35
  %v120 = vunpack.c.l.b16 %v36
  %v121 = vunpack.c.l.b16 %v37
  %v122 = vunpack.c.l.b16 %v38
  %v123 = vunpack.c.l.b16 %v39
  %v124 = vunpack.c.l.b16 %v40
  %v125 = vunpack.c.l.b16 %v41
  %v126 = vunpack.c.l.b16 %v42
  %v127 = vunpack.c.l.b16 %v43
  %v128 = vunpack.c.l.b16 %v44
  %v129 = vunpack.c.l.b16 %v45
  %v130 = vunpack.c.l.b16 %v46
  %v131 = vunpack.c.l.b16 %v47
  %v132 = vunpack.c.l.b16 %v48
  %v133 = vpack.c.b16 %v118, %v117
  %v134 = vpack.c.b16 %v120, %v119
  %v135 = vpack.c.b16 %v122, %v121
  %v136 = vpack.c.b16 %v124, %v123
  %v137 = vpack.c.b16 %v126, %v125
  %v138 = vpack.c.b16 %v128, %v127
  %v139 = vpack.c.b16 %v130, %v129
  %v140 = vpack.c.b16 %v132, %v131
  %149 = vmatpush.bf16.msra.mxu0 %v140
  %150 = vmatpush.bf16.msra.mxu0 %v139
  %151 = vmatpush.bf16.msra.mxu0 %v138
  %152 = vmatpush.bf16.msra.mxu0 %v137
  %153 = vmatpush.bf16.msra.mxu0 %v136
  %154 = vmatpush.bf16.msra.mxu0 %v135
  %155 = vmatpush.bf16.msra.mxu0 %v134
  %156 = vmatpush.bf16.msra.mxu0 %v133
  %157 = vmatmul.bf16.gmra.mxu0 %v85
  %v158 = vpop.f32.mrf.mxu0
  %v159 = vadd.f32 %v51, %v158
  %v160 = vpop.f32.mrf.mxu0
  %v161 = vadd.f32 %v51, %v160
  %162 = vmatmul.bf16.gmra.mxu0 %v86
  %v163 = vpop.f32.mrf.mxu0
  %v164 = vadd.f32 %v51, %v163
  %v165 = vpop.f32.mrf.mxu0
  %v166 = vadd.f32 %v51, %v165
  %167 = vmatmul.bf16.gmra.mxu0 %v87
  %v168 = vpop.f32.mrf.mxu0
  %v169 = vadd.f32 %v51, %v168
  %v170 = vpop.f32.mrf.mxu0
  %v171 = vadd.f32 %v51, %v170
  %172 = vmatmul.bf16.gmra.mxu0 %v88
  %v173 = vpop.f32.mrf.mxu0
  %v174 = vadd.f32 %v51, %v173
  %v175 = vpop.f32.mrf.mxu0
  %v176 = vadd.f32 %v51, %v175
  %177 = vmatmul.bf16.gmra.mxu0 %v89
  %v178 = vpop.f32.mrf.mxu0
  %v179 = vadd.f32 %v51, %v178
  %v180 = vpop.f32.mrf.mxu0
  %v181 = vadd.f32 %v51, %v180
  %182 = vmatmul.bf16.gmra.mxu0 %v90
  %v183 = vpop.f32.mrf.mxu0
  %v184 = vadd.f32 %v51, %v183
  %v185 = vpop.f32.mrf.mxu0
  %v186 = vadd.f32 %v51, %v185
  %187 = vmatmul.bf16.gmra.mxu0 %v91
  %v188 = vpop.f32.mrf.mxu0
  %v189 = vadd.f32 %v51, %v188
  %v190 = vpop.f32.mrf.mxu0
  %v191 = vadd.f32 %v51, %v190
  %192 = vmatmul.bf16.gmra.mxu0 %v92
  %v193 = vpop.f32.mrf.mxu0
  %v194 = vadd.f32 %v51, %v193
  %v195 = vpop.f32.mrf.mxu0
  %v196 = vadd.f32 %v51, %v195
  %197 = vdwg.mxu0
  %v198 = vld [vmem:[%s3] sm:$0xf]
  %v199 = vld [vmem:[%s3 + $0x4] sm:$0xf]
  %v200 = vld [vmem:[%s3 + $0x8] sm:$0xf]
  %v201 = vld [vmem:[%s3 + $0xc] sm:$0xf]
  %v202 = vld [vmem:[%s3 + $0x10] sm:$0xf]
  %v203 = vld [vmem:[%s3 + $0x14] sm:$0xf]
  %v204 = vld [vmem:[%s3 + $0x18] sm:$0xf]
  %v205 = vld [vmem:[%s3 + $0x1c] sm:$0xf]
  %v206 = vld [vmem:[%s3 + $0x20] sm:$0xf]
  %v207 = vld [vmem:[%s3 + $0x24] sm:$0xf]
  %v208 = vld [vmem:[%s3 + $0x28] sm:$0xf]
  %v209 = vld [vmem:[%s3 + $0x2c] sm:$0xf]
  %v210 = vld [vmem:[%s3 + $0x30] sm:$0xf]
  %v211 = vld [vmem:[%s3 + $0x34] sm:$0xf]
  %v212 = vld [vmem:[%s3 + $0x38] sm:$0xf]
  %v213 = vld [vmem:[%s3 + $0x3c] sm:$0xf]
  %v214 = vunpack.c.l.bf16 %v198
  %v215 = vunpack.c.l.bf16 %v199
  %v216 = vunpack.c.l.bf16 %v200
  %v217 = vunpack.c.l.bf16 %v201
  %v218 = vunpack.c.l.bf16 %v202
  %v219 = vunpack.c.l.bf16 %v203
  %v220 = vunpack.c.l.bf16 %v204
  %v221 = vunpack.c.l.bf16 %v205
  %v222 = vunpack.c.l.bf16 %v206
  %v223 = vunpack.c.l.bf16 %v207
  %v224 = vunpack.c.l.bf16 %v208
  %v225 = vunpack.c.l.bf16 %v209
  %v226 = vunpack.c.l.bf16 %v210
  %v227 = vunpack.c.l.bf16 %v211
  %v228 = vunpack.c.l.bf16 %v212
  %v229 = vunpack.c.l.bf16 %v213
  %v230 = vadd.f32 %v159, %v214
  %v231 = vadd.f32 %v161, %v215
  %v232 = vadd.f32 %v164, %v216
  %v233 = vadd.f32 %v166, %v217
  %v234 = vadd.f32 %v169, %v218
  %v235 = vadd.f32 %v171, %v219
  %v236 = vadd.f32 %v174, %v220
  %v237 = vadd.f32 %v176, %v221
  %v238 = vadd.f32 %v179, %v222
  %v239 = vadd.f32 %v181, %v223
  %v240 = vadd.f32 %v184, %v224
  %v241 = vadd.f32 %v186, %v225
  %v242 = vadd.f32 %v189, %v226
  %v243 = vadd.f32 %v191, %v227
  %v244 = vadd.f32 %v194, %v228
  %v245 = vadd.f32 %v196, %v229
  %v246 = vmax.f32 %v230, 0.0
  %v247 = vmax.f32 %v231, 0.0
  %v248 = vmax.f32 %v232, 0.0
  %v249 = vmax.f32 %v233, 0.0
  %v250 = vmax.f32 %v234, 0.0
  %v251 = vmax.f32 %v235, 0.0
  %v252 = vmax.f32 %v236, 0.0
  %v253 = vmax.f32 %v237, 0.0
  %v254 = vmax.f32 %v238, 0.0
  %v255 = vmax.f32 %v239, 0.0
  %v256 = vmax.f32 %v240, 0.0
  %v257 = vmax.f32 %v241, 0.0
  %v258 = vmax.f32 %v242, 0.0
  %v259 = vmax.f32 %v243, 0.0
  %v260 = vmax.f32 %v244, 0.0
  %v261 = vmax.f32 %v245, 0.0
  %262 = vst [vmem:[%s4] sm:$0xff] %v246
  %263 = vst [vmem:[%s4 + $0x8] sm:$0xff] %v247
  %264 = vst [vmem:[%s4 + $0x10] sm:$0xff] %v248
  %265 = vst [vmem:[%s4 + $0x18] sm:$0xff] %v249
  %266 = vst [vmem:[%s4 + $0x20] sm:$0xff] %v250
  %267 = vst [vmem:[%s4 + $0x28] sm:$0xff] %v251
  %268 = vst [vmem:[%s4 + $0x30] sm:$0xff] %v252
  %269 = vst [vmem:[%s4 + $0x38] sm:$0xff] %v253
  %270 = vst [vmem:[%s4 + $0x40] sm:$0xff] %v254
  %271 = vst [vmem:[%s4 + $0x48] sm:$0xff] %v255
  %272 = vst [vmem:[%s4 + $0x50] sm:$0xff] %v256
  %273 = vst [vmem:[%s4 + $0x58] sm:$0xff] %v257
  %274 = vst [vmem:[%s4 + $0x60] sm:$0xff] %v258
  %275 = vst [vmem:[%s4 + $0x68] sm:$0xff] %v259
  %276 = vst [vmem:[%s4 + $0x70] sm:$0xff] %v260
  %277 = vst [vmem:[%s4 + $0x78] sm:$0xff] %v261
  // Predicated region
  $region18: #{_lambda_.5} parent=0 // pred_check
    _
  $region19: #{_lambda_.5} parent=0 // pred_check_branch
    %279 = sbr.rel (0) target = $region21
  $region20: #{_lambda_.5} parent=0 // pred_region
    _
  $region21: #{_lambda_.5} parent=0 // pred_fallthru
    _
  // Predicated region
  $region22: #{_lambda_.5} parent=0 // pred_check
    _
  $region23: #{_lambda_.5} parent=0 // pred_check_branch
    %281 = sbr.rel (0) target = $region25
  $region24: #{_lambda_.5} parent=0 // pred_region
    _
  $region25: #{_lambda_.5} parent=0 // pred_fallthru
    _

</llo_original>
